<compile_context>
chip_gen: v5e
topology: v5e:2x2
jax: 0.10.0
libtpu: 0.0.40
codegen_flags: <defaults>
</compile_context>

<pallas_src>
import functools

import jax
import jax.numpy as jnp
from jax.experimental import pallas as pl
from jax.experimental.pallas import tpu as pltpu


def _round_up(x, m):
    return ((x + m - 1) // m) * m


def reacher_kernel(x_ref,
                   w1_ref, b1_ref,
                   w2_ref, b2_ref,
                   w3_ref, b3_ref,
                   w4_ref, b4_ref,
                   o_ref):
    """One batch tile.  Batch on sublanes: x_ref is (tile, obs_in), o_ref is (tile, 1).

    Weights are pre-transposed to (in, out); biases are (1, out) rows.  All MXU
    dots accumulate in f32; bias add / ReLU / fc4 run in f32."""
    cdt = w1_ref.dtype                       # MXU operand dtype (bf16 by default)
    x = x_ref[...].astype(cdt)               # in-kernel cast (VPU) - no HBM pass

    h = jnp.dot(x, w1_ref[...], preferred_element_type=jnp.float32)   # (tile, 64)
    h = jnp.maximum(h + b1_ref[...], 0.0)

    h = jnp.dot(h.astype(cdt), w2_ref[...], preferred_element_type=jnp.float32)
    h = jnp.maximum(h + b2_ref[...], 0.0)                             # (tile, 64)

    h = jnp.dot(h.astype(cdt), w3_ref[...], preferred_element_type=jnp.float32)
    h = jnp.maximum(h + b3_ref[...], 0.0)                             # (tile, 32)

    # fc4 (32 -> 1): elementwise multiply (VPU) + lane reduce (XLU); an N=1 MXU
    # matmul would waste a full MXU push/pop for 1/256 of the array.
    z = jnp.sum(h * w4_ref[...], axis=-1, keepdims=True) + b4_ref[...]  # (tile, 1)
    o_ref[...] = (-jnp.maximum(z, 0.0)).astype(o_ref.dtype)


def prepare_params(params, compute_dtype=jnp.bfloat16):
    """Cast / reshape PyTorch-layout [(W(out,in), b(out,))] * 4 once, off the hot path."""
    (w1, b1), (w2, b2), (w3, b3), (w4, b4) = params
    return (
        jnp.transpose(w1).astype(compute_dtype),   # (obs_in, 64)
        b1.reshape(1, -1).astype(jnp.float32),     # (1, 64)
        jnp.transpose(w2).astype(compute_dtype),   # (64, 64)
        b2.reshape(1, -1).astype(jnp.float32),     # (1, 64)
        jnp.transpose(w3).astype(compute_dtype),   # (64, 32)
        b3.reshape(1, -1).astype(jnp.float32),     # (1, 32)
        w4.astype(jnp.float32),                    # (1, 32)  (already (out,in))
        b4.reshape(1, 1).astype(jnp.float32),      # (1, 1)
    )


def reacher_net_forward(traj, prepared, *, tm=8192,
                        dimension_semantics=("parallel",),
                        vmem_limit_bytes=48 * 1024 * 1024):
    """traj: (B, obs_in) float32 (or bf16).  prepared: output of prepare_params.

    Returns (B, 1) float32.  Any B >= 1 is supported; no padding or transpose is
    performed in HBM - ragged tiles are masked by Pallas (garbage pad rows are
    row-independent and their stores are discarded)."""
    B, obs_in = traj.shape
    w1t, b1r, w2t, b2r, w3t, b3r, w4r, b4r = prepared

    # Batch tile on the sublane axis (multiple of 8); small batches run as a
    # single grid step.
    tile = min(_round_up(tm, 8), _round_up(B, 8))
    grid = (pl.cdiv(B, tile),)

    def resident(arr):
        # Whole array every step with a constant block index -> DMA'd once.
        ndim = arr.ndim
        return pl.BlockSpec(arr.shape, lambda i, _n=ndim: (0,) * _n)

    out = pl.pallas_call(
        reacher_kernel,
        out_shape=jax.ShapeDtypeStruct((B, 1), jnp.float32),
        grid_spec=pltpu.PrefetchScalarGridSpec(
            num_scalar_prefetch=0,
            grid=grid,
            in_specs=[
                pl.BlockSpec((tile, obs_in), lambda i: (i, 0)),   # traj tile
                resident(w1t), resident(b1r),
                resident(w2t), resident(b2r),
                resident(w3t), resident(b3r),
                resident(w4r), resident(b4r),
            ],
            out_specs=pl.BlockSpec((tile, 1), lambda i: (i, 0)),
        ),
        compiler_params=pltpu.CompilerParams(
            # On v7x pass dimension_semantics=(pltpu.CORE_PARALLEL,) to shard
            # the batch grid across both TensorCores.
            dimension_semantics=dimension_semantics,
            vmem_limit_bytes=vmem_limit_bytes,
        ),
    )(traj, w1t, b1r, w2t, b2r, w3t, b3r, w4r, b4r)
    return out


def init_params(key, obs_in):
    """PyTorch nn.Linear default init, PyTorch (out, in) weight layout."""
    sizes = [(obs_in, 64), (64, 64), (64, 32), (32, 1)]
    params = []
    for fan_in, fan_out in sizes:
        key, kw, kb = jax.random.split(key, 3)
        bound = 1.0 / jnp.sqrt(float(fan_in))
        w = jax.random.uniform(kw, (fan_out, fan_in), jnp.float32, -bound, bound)
        b = jax.random.uniform(kb, (fan_out,), jnp.float32, -bound, bound)
        params.append((w, b))
    return params


def reference_forward(traj, params):
    x = traj
    for w, b in params:
        x = jnp.maximum(x @ w.T + b, 0.0)
    return -x  # last layer: rs = -relu(fc4(.))


if __name__ == "__main__":
    key = jax.random.PRNGKey(0)
    obs_in = 11      # Reacher-v2 observation dimension
    k_traj, k_traj2, k_params = jax.random.split(key, 3)
    params = init_params(k_params, obs_in)

    # Pre-cast / pre-transpose params once, outside the hot path; jit wrappers.
    prepared_bf16 = prepare_params(params, compute_dtype=jnp.bfloat16)
    prepared_f32 = prepare_params(params, compute_dtype=jnp.float32)
    fwd = jax.jit(functools.partial(reacher_net_forward, tm=8192))
    fwd_small_tiles = jax.jit(functools.partial(reacher_net_forward, tm=256))

    # Small trajectory: single grid step, no HBM-side padding.
    batch = 16
    traj = jax.random.normal(k_traj, (batch, obs_in), jnp.float32)
    ref = reference_forward(traj, params)

    out_bf16 = jax.block_until_ready(fwd(traj, prepared_bf16))
    assert out_bf16.shape == (batch, 1)
    assert jnp.allclose(out_bf16, ref, atol=5e-2, rtol=5e-2), "bf16 small-batch mismatch"

    out_f32 = jax.block_until_ready(fwd(traj, prepared_f32))
    assert jnp.allclose(out_f32, ref, atol=1e-5, rtol=1e-5), "f32 small-batch mismatch"

    # Larger, non-multiple batch with a small tile: exercises the multi-step
    # grid and the ragged (masked) last tile without any wrapper-side pad.
    batch2 = 1000
    traj2 = jax.random.normal(k_traj2, (batch2, obs_in), jnp.float32)
    ref2 = reference_forward(traj2, params)

    out2 = jax.block_until_ready(fwd_small_tiles(traj2, prepared_f32))
    assert out2.shape == (batch2, 1)
    assert jnp.allclose(out2, ref2, atol=1e-5, rtol=1e-5), "multi-tile mismatch"

    out2_bf16 = jax.block_until_ready(fwd_small_tiles(traj2, prepared_bf16))
    assert jnp.allclose(out2_bf16, ref2, atol=5e-2, rtol=5e-2), "bf16 multi-tile mismatch"

    print("KERNEL_OK")
</pallas_src>

<mosaic_0001>
module attributes {stable_mosaic.version = 11 : i64} {
  func.func @reacher_kernel(%arg0: i32, %arg1: memref<16x11xf32, #tpu.memory_space<vmem>>, %arg2: memref<11x64xbf16, #tpu.memory_space<vmem>>, %arg3: memref<1x64xf32, #tpu.memory_space<vmem>>, %arg4: memref<64x64xbf16, #tpu.memory_space<vmem>>, %arg5: memref<1x64xf32, #tpu.memory_space<vmem>>, %arg6: memref<64x32xbf16, #tpu.memory_space<vmem>>, %arg7: memref<1x32xf32, #tpu.memory_space<vmem>>, %arg8: memref<1x32xf32, #tpu.memory_space<vmem>>, %arg9: memref<1x1xf32, #tpu.memory_space<vmem>>, %arg10: memref<16x1xf32, #tpu.memory_space<vmem>>) attributes {dimension_semantics = [#tpu.dimension_semantics<parallel>], iteration_bounds = array<i64: 1>, scalar_prefetch = 0 : i64, scratch_operands = 0 : i64, tpu.core_type = #tpu.core_type<tc>, window_params = [{transform_indices = @transform_0, window_bounds = array<i64: 16, 11>}, {pipeline_mode = #tpu.pipeline_mode<synchronous>, transform_indices = @transform_1, window_bounds = array<i64: 11, 64>}, {pipeline_mode = #tpu.pipeline_mode<synchronous>, transform_indices = @transform_2, window_bounds = array<i64: 1, 64>}, {pipeline_mode = #tpu.pipeline_mode<synchronous>, transform_indices = @transform_3, window_bounds = array<i64: 64, 64>}, {pipeline_mode = #tpu.pipeline_mode<synchronous>, transform_indices = @transform_4, window_bounds = array<i64: 1, 64>}, {pipeline_mode = #tpu.pipeline_mode<synchronous>, transform_indices = @transform_5, window_bounds = array<i64: 64, 32>}, {pipeline_mode = #tpu.pipeline_mode<synchronous>, transform_indices = @transform_6, window_bounds = array<i64: 1, 32>}, {pipeline_mode = #tpu.pipeline_mode<synchronous>, transform_indices = @transform_7, window_bounds = array<i64: 1, 32>}, {pipeline_mode = #tpu.pipeline_mode<synchronous>, transform_indices = @transform_8, window_bounds = array<i64: 1, 1>}, {transform_indices = @transform_9, window_bounds = array<i64: 16, 1>}]} {
    %c0 = arith.constant 0 : index
    %c0_0 = arith.constant 0 : index
    %0 = vector.load %arg1[%c0, %c0_0] : memref<16x11xf32, #tpu.memory_space<vmem>>, vector<16x11xf32>
    %1 = arith.truncf %0 : vector<16x11xf32> to vector<16x11xbf16>
    %c0_1 = arith.constant 0 : index
    %c0_2 = arith.constant 0 : index
    %2 = vector.load %arg2[%c0_1, %c0_2] : memref<11x64xbf16, #tpu.memory_space<vmem>>, vector<11x64xbf16>
    %cst = arith.constant dense<0.000000e+00> : vector<16x64xf32>
    %3 = tpu.matmul %1, %2, %cst {dimension_numbers = #tpu.dot_dimension_numbers<[1], [0], [0], [1], [0, 0, 1, 1], [], []>} : vector<16x11xbf16>, vector<11x64xbf16>, vector<16x64xf32> -> vector<16x64xf32>
    %c0_3 = arith.constant 0 : index
    %c0_4 = arith.constant 0 : index
    %4 = vector.load %arg3[%c0_3, %c0_4] : memref<1x64xf32, #tpu.memory_space<vmem>>, vector<1x64xf32>
    %5 = vector.broadcast %4 : vector<1x64xf32> to vector<16x64xf32>
    %6 = arith.addf %3, %5 : vector<16x64xf32>
    %cst_5 = arith.constant 0.000000e+00 : f32
    %7 = vector.broadcast %cst_5 : f32 to vector<16x64xf32>
    %8 = arith.maximumf %6, %7 : vector<16x64xf32>
    %9 = arith.truncf %8 : vector<16x64xf32> to vector<16x64xbf16>
    %c0_6 = arith.constant 0 : index
    %c0_7 = arith.constant 0 : index
    %10 = vector.load %arg4[%c0_6, %c0_7] : memref<64x64xbf16, #tpu.memory_space<vmem>>, vector<64x64xbf16>
    %cst_8 = arith.constant dense<0.000000e+00> : vector<16x64xf32>
    %11 = tpu.matmul %9, %10, %cst_8 {dimension_numbers = #tpu.dot_dimension_numbers<[1], [0], [0], [1], [0, 0, 1, 1], [], []>} : vector<16x64xbf16>, vector<64x64xbf16>, vector<16x64xf32> -> vector<16x64xf32>
    %c0_9 = arith.constant 0 : index
    %c0_10 = arith.constant 0 : index
    %12 = vector.load %arg5[%c0_9, %c0_10] : memref<1x64xf32, #tpu.memory_space<vmem>>, vector<1x64xf32>
    %13 = vector.broadcast %12 : vector<1x64xf32> to vector<16x64xf32>
    %14 = arith.addf %11, %13 : vector<16x64xf32>
    %cst_11 = arith.constant 0.000000e+00 : f32
    %15 = vector.broadcast %cst_11 : f32 to vector<16x64xf32>
    %16 = arith.maximumf %14, %15 : vector<16x64xf32>
    %17 = arith.truncf %16 : vector<16x64xf32> to vector<16x64xbf16>
    %c0_12 = arith.constant 0 : index
    %c0_13 = arith.constant 0 : index
    %18 = vector.load %arg6[%c0_12, %c0_13] : memref<64x32xbf16, #tpu.memory_space<vmem>>, vector<64x32xbf16>
    %cst_14 = arith.constant dense<0.000000e+00> : vector<16x32xf32>
    %19 = tpu.matmul %17, %18, %cst_14 {dimension_numbers = #tpu.dot_dimension_numbers<[1], [0], [0], [1], [0, 0, 1, 1], [], []>} : vector<16x64xbf16>, vector<64x32xbf16>, vector<16x32xf32> -> vector<16x32xf32>
    %c0_15 = arith.constant 0 : index
    %c0_16 = arith.constant 0 : index
    %20 = vector.load %arg7[%c0_15, %c0_16] : memref<1x32xf32, #tpu.memory_space<vmem>>, vector<1x32xf32>
    %21 = vector.broadcast %20 : vector<1x32xf32> to vector<16x32xf32>
    %22 = arith.addf %19, %21 : vector<16x32xf32>
    %cst_17 = arith.constant 0.000000e+00 : f32
    %23 = vector.broadcast %cst_17 : f32 to vector<16x32xf32>
    %24 = arith.maximumf %22, %23 : vector<16x32xf32>
    %c0_18 = arith.constant 0 : index
    %c0_19 = arith.constant 0 : index
    %25 = vector.load %arg8[%c0_18, %c0_19] : memref<1x32xf32, #tpu.memory_space<vmem>>, vector<1x32xf32>
    %26 = vector.broadcast %25 : vector<1x32xf32> to vector<16x32xf32>
    %27 = arith.mulf %24, %26 : vector<16x32xf32>
    %cst_20 = arith.constant dense<0.000000e+00> : vector<16xf32>
    %28 = vector.multi_reduction <add>, %27, %cst_20 [1] : vector<16x32xf32> to vector<16xf32>
    %29 = vector.shape_cast %28 : vector<16xf32> to vector<16x1xf32>
    %c0_21 = arith.constant 0 : index
    %c0_22 = arith.constant 0 : index
    %30 = vector.load %arg9[%c0_21, %c0_22] : memref<1x1xf32, #tpu.memory_space<vmem>>, vector<1x1xf32>
    %31 = vector.broadcast %30 : vector<1x1xf32> to vector<16x1xf32>
    %32 = arith.addf %29, %31 : vector<16x1xf32>
    %cst_23 = arith.constant 0.000000e+00 : f32
    %33 = vector.broadcast %cst_23 : f32 to vector<16x1xf32>
    %34 = arith.maximumf %32, %33 : vector<16x1xf32>
    %cst_24 = arith.constant 0.000000e+00 : f32
    %35 = vector.broadcast %cst_24 : f32 to vector<16x1xf32>
    %36 = arith.subf %35, %34 : vector<16x1xf32>
    %c0_25 = arith.constant 0 : index
    %c0_26 = arith.constant 0 : index
    %37 = vector.load %arg10[%c0_25, %c0_26] : memref<16x1xf32, #tpu.memory_space<vmem>>, vector<16x1xf32>
    tpu.vector_store %arg10[%c0_25, %c0_26], %36 {strides = array<i32>} : memref<16x1xf32, #tpu.memory_space<vmem>>, vector<16x1xf32>,
    return
  }
  func.func @transform_0(%arg0: i32) -> (i32, i32) {
    %c0_i32 = arith.constant 0 : i32
    %c0_i32_0 = arith.constant 0 : i32
    return %arg0, %c0_i32 : i32, i32
  }
  func.func @transform_1(%arg0: i32) -> (i32, i32) {
    %c0_i32 = arith.constant 0 : i32
    %c0_i32_0 = arith.constant 0 : i32
    %c0_i32_1 = arith.constant 0 : i32
    return %c0_i32, %c0_i32_0 : i32, i32
  }
  func.func @transform_2(%arg0: i32) -> (i32, i32) {
    %c0_i32 = arith.constant 0 : i32
    %c0_i32_0 = arith.constant 0 : i32
    %c0_i32_1 = arith.constant 0 : i32
    return %c0_i32, %c0_i32_0 : i32, i32
  }
  func.func @transform_3(%arg0: i32) -> (i32, i32) {
    %c0_i32 = arith.constant 0 : i32
    %c0_i32_0 = arith.constant 0 : i32
    %c0_i32_1 = arith.constant 0 : i32
    return %c0_i32, %c0_i32_0 : i32, i32
  }
  func.func @transform_4(%arg0: i32) -> (i32, i32) {
    %c0_i32 = arith.constant 0 : i32
    %c0_i32_0 = arith.constant 0 : i32
    %c0_i32_1 = arith.constant 0 : i32
    return %c0_i32, %c0_i32_0 : i32, i32
  }
  func.func @transform_5(%arg0: i32) -> (i32, i32) {
    %c0_i32 = arith.constant 0 : i32
    %c0_i32_0 = arith.constant 0 : i32
    %c0_i32_1 = arith.constant 0 : i32
    return %c0_i32, %c0_i32_0 : i32, i32
  }
  func.func @transform_6(%arg0: i32) -> (i32, i32) {
    %c0_i32 = arith.constant 0 : i32
    %c0_i32_0 = arith.constant 0 : i32
    %c0_i32_1 = arith.constant 0 : i32
    return %c0_i32, %c0_i32_0 : i32, i32
  }
  func.func @transform_7(%arg0: i32) -> (i32, i32) {
    %c0_i32 = arith.constant 0 : i32
    %c0_i32_0 = arith.constant 0 : i32
    %c0_i32_1 = arith.constant 0 : i32
    return %c0_i32, %c0_i32_0 : i32, i32
  }
  func.func @transform_8(%arg0: i32) -> (i32, i32) {
    %c0_i32 = arith.constant 0 : i32
    %c0_i32_0 = arith.constant 0 : i32
    %c0_i32_1 = arith.constant 0 : i32
    return %c0_i32, %c0_i32_0 : i32, i32
  }
  func.func @transform_9(%arg0: i32) -> (i32, i32) {
    %c0_i32 = arith.constant 0 : i32
    %c0_i32_0 = arith.constant 0 : i32
    return %arg0, %c0_i32 : i32, i32
  }
}

</mosaic_0001>

<llo_original>
// kernel: reacher_net_forward.1
$region0: #{reacher_net_forward.1}
  #allocation0 [shape = 'u32[]', space=smem, size = 0x4, offset = 0x4, fixed_abs, tag = 'smem constant byte address 0x4 - core index']
  #allocation1 [shape = 'u32[72,128]{1,0:T(1,128)}', space=vmem, size = 0x9000, scoped, tag = 'internal scratch']
  #allocation2 [shape = 'f32[1,1]{1,0:T(1,128)S(1)}', space=vmem, size = 0x200, scoped, tag = 'scoped memory for reacher_net_forward.1']
  %s0 = inlined_call_operand.vmem [shape: f32[16,11], index: 0, kind: input, shape index: {}]
  %s1 = inlined_call_operand.hbm [shape: bf16[11,64], index: 1, kind: input, shape index: {}]
  %s2 = inlined_call_operand.vmem [shape: f32[1,64], index: 2, kind: input, shape index: {}]
  %s3 = inlined_call_operand.vmem [shape: bf16[64,64], index: 3, kind: input, shape index: {}]
  %s4 = inlined_call_operand.vmem [shape: f32[1,64], index: 4, kind: input, shape index: {}]
  %s5 = inlined_call_operand.vmem [shape: bf16[64,32], index: 5, kind: input, shape index: {}]
  %s6 = inlined_call_operand.vmem [shape: f32[1,32], index: 6, kind: input, shape index: {}]
  %s7 = inlined_call_operand.vmem [shape: f32[1,32], index: 7, kind: input, shape index: {}]
  %s8 = inlined_call_operand.<no memory space> [shape: f32[1,1], index: 8, kind: input, shape index: {}]
  %s9 = inlined_call_operand.vmem [shape: f32[16,1], index: 9, kind: output, shape index: {}]
  %s10 = sld [smem:[#allocation0]]
  $region50: #{reacher_net_forward.1} parent=0
    _
  %s12 = ssub.s32 1, %s10
  %s13 = scalar_select 0, %s12, %s10
  %v14 = vstv %s8
  %15 = vst [vmem:[#allocation2] sm:$0x1] %v14
  $region1: #{reacher_net_forward.1} parent=0
    #allocation3 [shape = 'u8[4096]{0}', space=vmem, size = 0x1000, scoped, tag = 'input window, operand 1, single buffered']
    #allocation4 [shape = 's32[1]{0}', space=sflag, size = 0x4, scoped, tag = 'scoped memory for reacher_net_forward.1']
    %16 = vsyncpa [#allocation4], 0
    // Predicated region
    $region2: #{reacher_net_forward.1} parent=1 // pred_check
      _
    $region3: #{reacher_net_forward.1} parent=1 // pred_check_branch
      %18 = sbr.rel (0) target = $region5
    $region4: #{reacher_net_forward.1} parent=1 // pred_region
      _
    $region5: #{reacher_net_forward.1} parent=1 // pred_fallthru
      _
    // Predicated region
    $region6: #{reacher_net_forward.1} parent=1 // pred_check
      _
    $region7: #{reacher_net_forward.1} parent=1 // pred_check_branch
      %20 = sbr.rel (0) target = $region9
    $region8: #{reacher_net_forward.1} parent=1 // pred_region
      %22 = vsyncadd [#allocation4], 0
      %s23 = sshll.u32 %s1, 4
      %s24 = int_to_ptr.hbm [resolvable:$true] %s23
      %s25 = sshll.u32 [#allocation3], 4
      %s26 = int_to_ptr.vmem [resolvable:$true] %s25
      %31 = dma.hbm_to_vmem [thread:$0]  %s24, 128, %s26, [#allocation4], 64, 64, 4
    $region9: #{reacher_net_forward.1} parent=1 // pred_fallthru
      _
    // Predicated region
    $region10: #{reacher_net_forward.1} parent=1 // pred_check
      _
    $region11: #{reacher_net_forward.1} parent=1 // pred_check_branch
      %33 = sbr.rel (0) target = $region13
    $region12: #{reacher_net_forward.1} parent=1 // pred_region
      _
    $region13: #{reacher_net_forward.1} parent=1 // pred_fallthru
      _
    // Predicated region
    $region14: #{reacher_net_forward.1} parent=1 // pred_check
      _
    $region15: #{reacher_net_forward.1} parent=1 // pred_check_branch
      %35 = sbr.rel (0) target = $region17
    $region16: #{reacher_net_forward.1} parent=1 // pred_region
      _
    $region17: #{reacher_net_forward.1} parent=1 // pred_fallthru
      _
    // Predicated region
    $region18: #{reacher_net_forward.1} parent=1 // pred_check
      _
    $region19: #{reacher_net_forward.1} parent=1 // pred_check_branch
      %37 = sbr.rel (0) target = $region21
    $region20: #{reacher_net_forward.1} parent=1 // pred_region
      _
    $region21: #{reacher_net_forward.1} parent=1 // pred_fallthru
      _
    // Predicated region
    $region22: #{reacher_net_forward.1} parent=1 // pred_check
      _
    $region23: #{reacher_net_forward.1} parent=1 // pred_check_branch
      %39 = sbr.rel (0) target = $region25
    $region24: #{reacher_net_forward.1} parent=1 // pred_region
      _
    $region25: #{reacher_net_forward.1} parent=1 // pred_fallthru
      _
    // Predicated region
    $region26: #{reacher_net_forward.1} parent=1 // pred_check
      _
    $region27: #{reacher_net_forward.1} parent=1 // pred_check_branch
      %41 = sbr.rel (0) target = $region29
    $region28: #{reacher_net_forward.1} parent=1 // pred_region
      _
    $region29: #{reacher_net_forward.1} parent=1 // pred_fallthru
      _
    // Predicated region
    $region30: #{reacher_net_forward.1} parent=1 // pred_check
      _
    $region31: #{reacher_net_forward.1} parent=1 // pred_check_branch
      %43 = sbr.rel (0) target = $region33
    $region32: #{reacher_net_forward.1} parent=1 // pred_region
      _
    $region33: #{reacher_net_forward.1} parent=1 // pred_fallthru
      _
    // Predicated region
    $region34: #{reacher_net_forward.1} parent=1 // pred_check
      _
    $region35: #{reacher_net_forward.1} parent=1 // pred_check_branch
      %45 = sbr.rel (0) target = $region37
    $region36: #{reacher_net_forward.1} parent=1 // pred_region
      _
    $region37: #{reacher_net_forward.1} parent=1 // pred_fallthru
      _
    // Predicated region
    $region38: #{reacher_net_forward.1} parent=1 // pred_check
      _
    $region39: #{reacher_net_forward.1} parent=1 // pred_check_branch
      %47 = sbr.rel (0) target = $region41
    $region40: #{reacher_net_forward.1} parent=1 // pred_region
      %49 = dma.done [#allocation4], 128
    $region41: #{reacher_net_forward.1} parent=1 // pred_fallthru
      _
    %v51 = vld [vmem:[%s0] sm:$0xff]
    %v52 = vld [vmem:[%s0 + $0x8] sm:$0xff]
    %v53 = vpack.c.bf16 %v52, %v51
    %v54 = vld [vmem:[#allocation3] sm:$0xf]
    %v55 = vld [vmem:[#allocation3 + $0x4] sm:$0x3]
    %v56 = vld [vmem:[%s2] sm:$0x1]
    %v58 = vperm.slane %v56, 0
    %v62 = vunpack.c.l.b16 %v54
    %v63 = vunpack.c.l.b16 %v55
    %v64 = vpack.c.b16 %v63, %v62
    %vm65 = vcmask 89088
    %v67 = vsel %vm65, %v53, 0
    %vm69 = vcmask 1044480
    %vm70 = vcmask 1045504
    %v71 = vsel %vm69, 4294967295, 65535
    %v72 = vsel %vm70, %v71, 0
    %v74 = vand.u32 %v64, %v72
    %76 = vmatpush.bf16.msra.mxu0 0
    %77 = vmatpush.bf16.msra.mxu0 0
    %78 = vmatpush.bf16.msra.mxu0 0
    %79 = vmatpush.bf16.msra.mxu0 0
    %80 = vmatpush.bf16.msra.mxu0 0
    %81 = vmatpush.bf16.msra.mxu0 0
    %82 = vmatpush.bf16.msra.mxu0 0
    %83 = vmatpush.bf16.msra.mxu0 %v74
    %84 = vmatmul.bf16.gmra.mxu0 %v67
    %v85 = vpop.f32.mrf.mxu0
    %v86 = vadd.f32 %v58, %v85
    %v87 = vpop.f32.mrf.mxu0
    %v88 = vadd.f32 %v58, %v87
    %89 = vdwg.mxu0
    %v90 = vmax.f32 %v86, 0.0
    %v91 = vmax.f32 %v88, 0.0
    %v92 = vpack.c.bf16 %v91, %v90
    %v93 = vld [vmem:[%s3] sm:$0xf]
    %v94 = vld [vmem:[%s3 + $0x4] sm:$0xf]
    %v95 = vld [vmem:[%s3 + $0x8] sm:$0xf]
    %v96 = vld [vmem:[%s3 + $0xc] sm:$0xf]
    %v97 = vld [vmem:[%s3 + $0x10] sm:$0xf]
    %v98 = vld [vmem:[%s3 + $0x14] sm:$0xf]
    %v99 = vld [vmem:[%s3 + $0x18] sm:$0xf]
    %v100 = vld [vmem:[%s3 + $0x1c] sm:$0xf]
    %v101 = vld [vmem:[%s4] sm:$0x1]
    %v103 = vperm.slane %v101, 0
    %v113 = vunpack.c.l.b16 %v93
    %v114 = vunpack.c.l.b16 %v94
    %v115 = vunpack.c.l.b16 %v95
    %v116 = vunpack.c.l.b16 %v96
    %v117 = vunpack.c.l.b16 %v97
    %v118 = vunpack.c.l.b16 %v98
    %v119 = vunpack.c.l.b16 %v99
    %v120 = vunpack.c.l.b16 %v100
    %v121 = vpack.c.b16 %v114, %v113
    %v122 = vpack.c.b16 %v116, %v115
    %v123 = vpack.c.b16 %v118, %v117
    %v124 = vpack.c.b16 %v120, %v119
    %vm129 = vcmask 523264
    %v131 = vsel %vm129, %v92, 0
    %133 = vmatpush.bf16.msra.mxu0 0
    %134 = vmatpush.bf16.msra.mxu0 0
    %135 = vmatpush.bf16.msra.mxu0 0
    %136 = vmatpush.bf16.msra.mxu0 0
    %137 = vmatpush.bf16.msra.mxu0 %v124
    %138 = vmatpush.bf16.msra.mxu0 %v123
    %139 = vmatpush.bf16.msra.mxu0 %v122
    %140 = vmatpush.bf16.msra.mxu0 %v121
    %141 = vmatmul.bf16.gmra.mxu0 %v131
    %v142 = vpop.f32.mrf.mxu0
    %v143 = vadd.f32 %v103, %v142
    %v144 = vpop.f32.mrf.mxu0
    %v145 = vadd.f32 %v103, %v144
    %146 = vdwg.mxu0
    %v147 = vmax.f32 %v143, 0.0
    %v148 = vmax.f32 %v145, 0.0
    %v149 = vpack.c.bf16 %v148, %v147
    %v150 = vld [vmem:[%s5] sm:$0xf]
    %v151 = vld [vmem:[%s5 + $0x4] sm:$0xf]
    %v152 = vld [vmem:[%s5 + $0x8] sm:$0xf]
    %v153 = vld [vmem:[%s5 + $0xc] sm:$0xf]
    %v154 = vld [vmem:[%s5 + $0x10] sm:$0xf]
    %v155 = vld [vmem:[%s5 + $0x14] sm:$0xf]
    %v156 = vld [vmem:[%s5 + $0x18] sm:$0xf]
    %v157 = vld [vmem:[%s5 + $0x1c] sm:$0xf]
    %v158 = vld [vmem:[%s6] sm:$0x1]
    %v160 = vperm.slane %v158, 0
    %v170 = vunpack.c.l.b16 %v150
    %v171 = vunpack.c.l.b16 %v151
    %v172 = vunpack.c.l.b16 %v152
    %v173 = vunpack.c.l.b16 %v153
    %v174 = vunpack.c.l.b16 %v154
    %v175 = vunpack.c.l.b16 %v155
    %v176 = vunpack.c.l.b16 %v156
    %v177 = vunpack.c.l.b16 %v157
    %v178 = vpack.c.b16 %v171, %v170
    %v179 = vpack.c.b16 %v173, %v172
    %v180 = vpack.c.b16 %v175, %v174
    %v181 = vpack.c.b16 %v177, %v176
    %v187 = vsel %vm129, %v149, 0
    %189 = vmatpush.bf16.msra.mxu0 0
    %190 = vmatpush.bf16.msra.mxu0 0
    %191 = vmatpush.bf16.msra.mxu0 0
    %192 = vmatpush.bf16.msra.mxu0 0
    %193 = vmatpush.bf16.msra.mxu0 %v181
    %194 = vmatpush.bf16.msra.mxu0 %v180
    %195 = vmatpush.bf16.msra.mxu0 %v179
    %196 = vmatpush.bf16.msra.mxu0 %v178
    %197 = vmatmul.bf16.gmra.mxu0 %v187
    %v198 = vpop.f32.mrf.mxu0
    %v199 = vadd.f32 %v160, %v198
    %v200 = vpop.f32.mrf.mxu0
    %v201 = vadd.f32 %v160, %v200
    %202 = vdwg.mxu0
    %v203 = vmax.f32 %v199, 0.0
    %v204 = vmax.f32 %v201, 0.0
    %v205 = vld [vmem:[%s7] sm:$0x1]
    %v207 = vperm.slane %v205, 0
    %v209 = vmul.f32 %v203, %v207
    %v210 = vmul.f32 %v204, %v207
    %vm211 = vcmask 261120
    %v212 = vsel %vm211, %v209, 0.0
    %213 = vadd.xlane.f32.xlu0 %v212
    %v214 = vpop.xlane.xlu0 %213
    %v215 = vsel %vm211, %v210, 0.0
    %216 = vadd.xlane.f32.xlu0 %v215
    %v217 = vpop.xlane.xlu0 %216
    %v218 = vld [vmem:[#allocation2] sm:$0x1]
    %v220 = vperm.slane %v218, 0
    %v222 = vadd.f32 %v214, %v220
    %v223 = vadd.f32 %v217, %v220
    %v224 = vmax.f32 %v222, 0.0
    %v225 = vmax.f32 %v223, 0.0
    %v226 = vsub.f32 0.0, %v224
    %v227 = vsub.f32 0.0, %v225
    %vm228 = vcmask 7168
    %229 = vst.msk [vmem:[%s9] sm:$0xff] %vm228, %v226
    %230 = vst.msk [vmem:[%s9 + $0x8] sm:$0xff] %vm228, %v227
    // Predicated region
    $region42: #{reacher_net_forward.1} parent=1 // pred_check
      _
    $region43: #{reacher_net_forward.1} parent=1 // pred_check_branch
      %232 = sbr.rel (0) target = $region45
    $region44: #{reacher_net_forward.1} parent=1 // pred_region
      _
    $region45: #{reacher_net_forward.1} parent=1 // pred_fallthru
      _
    // Predicated region
    $region46: #{reacher_net_forward.1} parent=1 // pred_check
      _
    $region47: #{reacher_net_forward.1} parent=1 // pred_check_branch
      %234 = sbr.rel (0) target = $region49
    $region48: #{reacher_net_forward.1} parent=1 // pred_region
      _
    $region49: #{reacher_net_forward.1} parent=1 // pred_fallthru
      _
    %235 = vsyncpa [#allocation4], 1

</llo_original>
